<compile_context>
chip_gen: v5e
topology: v5e:2x2
jax: 0.10.0
libtpu: 0.0.40
codegen_flags: <defaults>
</compile_context>

<pallas_src>
import functools

import jax
import jax.numpy as jnp
from jax.experimental import pallas as pl
from jax.experimental.pallas import tpu as pltpu


def _round_up(n: int, m: int) -> int:
    return ((n + m - 1) // m) * m


def mlp_kernel(x_ref, w1_ref, b1_ref, w2_ref, b2_ref, o_ref):
    # In-kernel bf16 cast of activations (x stays f32 in HBM: 4 B/elem read once;
    # no wrapper-side pad/convert launch or bf16 round-trip).
    x = x_ref[...].astype(jnp.bfloat16)
    # fc1 on the MXU with f32 accumulation.
    h = jnp.dot(x, w1_ref[...], preferred_element_type=jnp.float32)
    # Bias + ReLU in f32 on the VPU.
    h = jnp.maximum(h + b1_ref[...], 0.0)
    # fc2: cast activations to bf16 only at the MXU input. H stays on the lane
    # axis for both dots -> no transpose / XLU traffic between the matmuls.
    logits = jnp.dot(h.astype(jnp.bfloat16), w2_ref[...],
                     preferred_element_type=jnp.float32)
    logits = logits + b2_ref[...]
    # Numerically stable softmax over the feature (lane) axis. Padded output
    # lanes carry a -1e30 bias, so exp() sends them to exactly 0 and they
    # contribute nothing to the denominator.
    m = jnp.max(logits, axis=-1, keepdims=True)
    e = jnp.exp(logits - m)
    denom = jnp.sum(e, axis=-1, keepdims=True)
    # Exact reciprocal (approx=False): negligible cost, rows sum to 1 exactly.
    o_ref[...] = (e * pl.reciprocal(denom)).astype(o_ref.dtype)


def prepare_params(w1, b1, w2, b2):
    """One-time parameter prep (lane-pad + bf16 cast). Reuse across forward calls.

    w1: [D_in, H]; b1: [H]; w2: [H, D_out]; b2: [D_out].
    Returns ((w1_p, b1_p, w2_p, b2_p), D_out).
    """
    D_in, H = w1.shape
    D_out = w2.shape[1]
    H_pad = _round_up(H, 128)
    D_out_pad = _round_up(D_out, 128)

    w1_p = jnp.zeros((D_in, H_pad), jnp.bfloat16).at[:, :H].set(w1.astype(jnp.bfloat16))
    b1_p = jnp.zeros((1, H_pad), jnp.float32).at[0, :H].set(b1.astype(jnp.float32))
    w2_p = jnp.zeros((H_pad, D_out_pad), jnp.bfloat16).at[:H, :D_out].set(
        w2.astype(jnp.bfloat16))
    # Padded logit lanes get a huge negative bias -> softmax probability exactly 0.
    b2_p = jnp.full((1, D_out_pad), -1e30, jnp.float32).at[0, :D_out].set(
        b2.astype(jnp.float32))
    return (w1_p, b1_p, w2_p, b2_p), int(D_out)


@functools.partial(jax.jit, static_argnames=("d_out", "block_b"))
def mlp_classifier_forward(x, params, d_out, *, block_b=128):
    """x: [B, D_in] f32; params: output of prepare_params; d_out: true output dim."""
    w1_p, b1_p, w2_p, b2_p = params
    B, D_in = x.shape
    assert w1_p.shape[0] == D_in
    H_pad = w1_p.shape[1]
    D_out_pad = w2_p.shape[1]

    # Batch tile: multiple of 8 sublanes; give the "parallel" batch axis at
    # least 2 grid steps once B >= 16 so v7x's 2nd TensorCore has work.
    if B < 8:
        TB = B                                   # block == full dim (allowed)
    elif B < 16:
        TB = 8
    else:
        TB = min(block_b, _round_up((B + 1) // 2, 8))
    grid_b = pl.cdiv(B, TB)                      # remainder handled by boundary masking

    # Explicit VMEM budget: resident weights/biases + double-buffered x / out
    # tiles, clamped to v7x's 64 MiB physical VMEM (safe on v5e/v6e too).
    resident_bytes = (w1_p.size + w2_p.size) * 2 + (b1_p.size + b2_p.size) * 4
    tile_bytes = 2 * (TB * D_in * 4) + 2 * (TB * D_out_pad * 4)
    vmem_limit = int(min(max(2 * (resident_bytes + tile_bytes), 32 << 20), 64 << 20))
    # TODO(synk): if D_in * H_pad grows past this budget, add an innermost
    # "arbitrary" K-tiling grid axis over D_in so w1 streams instead of sitting
    # fully VMEM-resident.

    out_padded = pl.pallas_call(
        mlp_kernel,
        out_shape=jax.ShapeDtypeStruct((B, D_out_pad), jnp.float32),
        grid=(grid_b,),
        in_specs=[
            pl.BlockSpec((TB, D_in), lambda i: (i, 0)),          # x: batch-tiled, f32
            pl.BlockSpec((D_in, H_pad), lambda i: (0, 0)),       # weights / biases:
            pl.BlockSpec((1, H_pad), lambda i: (0, 0)),          # constant index_map
            pl.BlockSpec((H_pad, D_out_pad), lambda i: (0, 0)),  # -> VMEM-resident,
            pl.BlockSpec((1, D_out_pad), lambda i: (0, 0)),      # no re-DMA per step
        ],
        out_specs=pl.BlockSpec((TB, D_out_pad), lambda i: (i, 0)),
        compiler_params=pltpu.CompilerParams(
            dimension_semantics=("parallel",),   # batch axis: shardable across TCs
            vmem_limit_bytes=vmem_limit,
        ),
    )(x, w1_p, b1_p, w2_p, b2_p)

    # Lane padding sliced off outside the kernel. For small B the lane-dense
    # unmasked store inside the kernel is the right trade; for very large B a
    # bf16 or (B, D_out) output would cut writeback bytes.
    return out_padded[:, :d_out]


if __name__ == "__main__":
    # Small shapes consistent with the module's forward pass.
    B, input_dim, hidden_dim, output_dim = 8, 16, 32, 2

    key = jax.random.PRNGKey(0)
    kx, kw1, kb1, kw2, kb2 = jax.random.split(key, 5)

    x = jax.random.normal(kx, (B, input_dim), dtype=jnp.float32)
    # Deterministic parameter init (uniform, matching nn.Linear fan-in scaling).
    w1 = jax.random.uniform(kw1, (input_dim, hidden_dim), jnp.float32,
                            minval=-1.0, maxval=1.0) / jnp.sqrt(input_dim)
    b1 = jax.random.uniform(kb1, (hidden_dim,), jnp.float32,
                            minval=-1.0, maxval=1.0) / jnp.sqrt(input_dim)
    w2 = jax.random.uniform(kw2, (hidden_dim, output_dim), jnp.float32,
                            minval=-1.0, maxval=1.0) / jnp.sqrt(hidden_dim)
    b2 = jax.random.uniform(kb2, (output_dim,), jnp.float32,
                            minval=-1.0, maxval=1.0) / jnp.sqrt(hidden_dim)

    # One-time parameter prep (padding + bf16 cast hoisted out of the hot path).
    params, d_out = prepare_params(w1, b1, w2, b2)
    params = jax.block_until_ready(params)

    out = mlp_classifier_forward(x, params, d_out)
    out = jax.block_until_ready(out)

    # Pure-JAX f32 reference (kernel uses bf16 MXU operands, so probability
    # outputs carry ~1e-2 relative error vs an all-f32 reference).
    h_ref = jnp.maximum(x @ w1 + b1, 0.0)
    logits_ref = h_ref @ w2 + b2
    ref = jax.nn.softmax(logits_ref, axis=1)

    assert out.shape == (B, output_dim)
    assert jnp.allclose(out, ref, atol=2e-2, rtol=2e-2)
    assert jnp.allclose(jnp.sum(out, axis=1), 1.0, atol=1e-3)

    print("KERNEL_OK")
</pallas_src>

<mosaic_0001>
module attributes {stable_mosaic.version = 11 : i64} {
  func.func @mlp_kernel(%arg0: i32, %arg1: memref<8x16xf32, #tpu.memory_space<vmem>>, %arg2: memref<16x128xbf16, #tpu.memory_space<vmem>>, %arg3: memref<1x128xf32, #tpu.memory_space<vmem>>, %arg4: memref<128x128xbf16, #tpu.memory_space<vmem>>, %arg5: memref<1x128xf32, #tpu.memory_space<vmem>>, %arg6: memref<8x128xf32, #tpu.memory_space<vmem>>) attributes {dimension_semantics = [#tpu.dimension_semantics<parallel>], iteration_bounds = array<i64: 1>, scalar_prefetch = 0 : i64, scratch_operands = 0 : i64, tpu.core_type = #tpu.core_type<tc>, window_params = [{transform_indices = @transform_0, window_bounds = array<i64: 8, 16>}, {pipeline_mode = #tpu.pipeline_mode<synchronous>, transform_indices = @transform_1, window_bounds = array<i64: 16, 128>}, {pipeline_mode = #tpu.pipeline_mode<synchronous>, transform_indices = @transform_2, window_bounds = array<i64: 1, 128>}, {pipeline_mode = #tpu.pipeline_mode<synchronous>, transform_indices = @transform_3, window_bounds = array<i64: 128, 128>}, {pipeline_mode = #tpu.pipeline_mode<synchronous>, transform_indices = @transform_4, window_bounds = array<i64: 1, 128>}, {transform_indices = @transform_5, window_bounds = array<i64: 8, 128>}]} {
    %c0 = arith.constant 0 : index
    %c0_0 = arith.constant 0 : index
    %0 = vector.load %arg1[%c0, %c0_0] : memref<8x16xf32, #tpu.memory_space<vmem>>, vector<8x16xf32>
    %1 = arith.truncf %0 : vector<8x16xf32> to vector<8x16xbf16>
    %c0_1 = arith.constant 0 : index
    %c0_2 = arith.constant 0 : index
    %2 = vector.load %arg2[%c0_1, %c0_2] : memref<16x128xbf16, #tpu.memory_space<vmem>>, vector<16x128xbf16>
    %cst = arith.constant dense<0.000000e+00> : vector<8x128xf32>
    %3 = tpu.matmul %1, %2, %cst {dimension_numbers = #tpu.dot_dimension_numbers<[1], [0], [0], [1], [0, 0, 1, 1], [], []>} : vector<8x16xbf16>, vector<16x128xbf16>, vector<8x128xf32> -> vector<8x128xf32>
    %c0_3 = arith.constant 0 : index
    %c0_4 = arith.constant 0 : index
    %4 = vector.load %arg3[%c0_3, %c0_4] : memref<1x128xf32, #tpu.memory_space<vmem>>, vector<1x128xf32>
    %5 = vector.broadcast %4 : vector<1x128xf32> to vector<8x128xf32>
    %6 = arith.addf %3, %5 : vector<8x128xf32>
    %cst_5 = arith.constant 0.000000e+00 : f32
    %7 = vector.broadcast %cst_5 : f32 to vector<8x128xf32>
    %8 = arith.maximumf %6, %7 : vector<8x128xf32>
    %9 = arith.truncf %8 : vector<8x128xf32> to vector<8x128xbf16>
    %c0_6 = arith.constant 0 : index
    %c0_7 = arith.constant 0 : index
    %10 = vector.load %arg4[%c0_6, %c0_7] : memref<128x128xbf16, #tpu.memory_space<vmem>>, vector<128x128xbf16>
    %cst_8 = arith.constant dense<0.000000e+00> : vector<8x128xf32>
    %11 = tpu.matmul %9, %10, %cst_8 {dimension_numbers = #tpu.dot_dimension_numbers<[1], [0], [0], [1], [0, 0, 1, 1], [], []>} : vector<8x128xbf16>, vector<128x128xbf16>, vector<8x128xf32> -> vector<8x128xf32>
    %c0_9 = arith.constant 0 : index
    %c0_10 = arith.constant 0 : index
    %12 = vector.load %arg5[%c0_9, %c0_10] : memref<1x128xf32, #tpu.memory_space<vmem>>, vector<1x128xf32>
    %13 = vector.broadcast %12 : vector<1x128xf32> to vector<8x128xf32>
    %14 = arith.addf %11, %13 : vector<8x128xf32>
    %cst_11 = arith.constant dense<0xFF800000> : vector<8xf32>
    %15 = vector.multi_reduction <maximumf>, %14, %cst_11 [1] : vector<8x128xf32> to vector<8xf32>
    %16 = vector.shape_cast %15 : vector<8xf32> to vector<8x1xf32>
    %17 = vector.broadcast %16 : vector<8x1xf32> to vector<8x128xf32>
    %18 = arith.subf %14, %17 : vector<8x128xf32>
    %19 = math.exp %18 : vector<8x128xf32>
    %cst_12 = arith.constant dense<0.000000e+00> : vector<8xf32>
    %20 = vector.multi_reduction <add>, %19, %cst_12 [1] : vector<8x128xf32> to vector<8xf32>
    %21 = vector.shape_cast %20 : vector<8xf32> to vector<8x1xf32>
    %22 = tpu.reciprocal %21 : vector<8x1xf32> -> vector<8x1xf32>
    %23 = vector.broadcast %22 : vector<8x1xf32> to vector<8x128xf32>
    %24 = arith.mulf %19, %23 : vector<8x128xf32>
    %c0_13 = arith.constant 0 : index
    %c0_14 = arith.constant 0 : index
    %25 = vector.load %arg6[%c0_13, %c0_14] : memref<8x128xf32, #tpu.memory_space<vmem>>, vector<8x128xf32>
    tpu.vector_store %arg6[%c0_13, %c0_14], %24 {strides = array<i32>} : memref<8x128xf32, #tpu.memory_space<vmem>>, vector<8x128xf32>,
    return
  }
  func.func @transform_0(%arg0: i32) -> (i32, i32) {
    %c0_i32 = arith.constant 0 : i32
    %c0_i32_0 = arith.constant 0 : i32
    return %arg0, %c0_i32 : i32, i32
  }
  func.func @transform_1(%arg0: i32) -> (i32, i32) {
    %c0_i32 = arith.constant 0 : i32
    %c0_i32_0 = arith.constant 0 : i32
    %c0_i32_1 = arith.constant 0 : i32
    return %c0_i32, %c0_i32_0 : i32, i32
  }
  func.func @transform_2(%arg0: i32) -> (i32, i32) {
    %c0_i32 = arith.constant 0 : i32
    %c0_i32_0 = arith.constant 0 : i32
    %c0_i32_1 = arith.constant 0 : i32
    return %c0_i32, %c0_i32_0 : i32, i32
  }
  func.func @transform_3(%arg0: i32) -> (i32, i32) {
    %c0_i32 = arith.constant 0 : i32
    %c0_i32_0 = arith.constant 0 : i32
    %c0_i32_1 = arith.constant 0 : i32
    return %c0_i32, %c0_i32_0 : i32, i32
  }
  func.func @transform_4(%arg0: i32) -> (i32, i32) {
    %c0_i32 = arith.constant 0 : i32
    %c0_i32_0 = arith.constant 0 : i32
    %c0_i32_1 = arith.constant 0 : i32
    return %c0_i32, %c0_i32_0 : i32, i32
  }
  func.func @transform_5(%arg0: i32) -> (i32, i32) {
    %c0_i32 = arith.constant 0 : i32
    %c0_i32_0 = arith.constant 0 : i32
    return %arg0, %c0_i32 : i32, i32
  }
}

</mosaic_0001>

<llo_original>
// kernel: mlp_classifier_forward.1
$region0: #{mlp_classifier_forward.1}
  #allocation0 [shape = 'u32[]', space=smem, size = 0x4, offset = 0x4, fixed_abs, tag = 'smem constant byte address 0x4 - core index']
  #allocation1 [shape = 'u32[72,128]{1,0:T(1,128)}', space=vmem, size = 0x9000, scoped, tag = 'internal scratch']
  %s0 = inlined_call_operand.hbm [shape: f32[8,16], index: 0, kind: input, shape index: {}]
  %s1 = inlined_call_operand.hbm [shape: bf16[16,128], index: 1, kind: input, shape index: {}]
  %s2 = inlined_call_operand.vmem [shape: f32[1,128], index: 2, kind: input, shape index: {}]
  %s3 = inlined_call_operand.hbm [shape: bf16[128,128], index: 3, kind: input, shape index: {}]
  %s4 = inlined_call_operand.vmem [shape: f32[1,128], index: 4, kind: input, shape index: {}]
  %s5 = inlined_call_operand.vmem [shape: f32[8,128], index: 5, kind: output, shape index: {}]
  %s6 = sld [smem:[#allocation0]]
  $region42: #{mlp_classifier_forward.1} parent=0
    _
  %s8 = ssub.s32 1, %s6
  %s9 = scalar_select 0, %s8, %s6
  $region1: #{mlp_classifier_forward.1} parent=0
    #allocation2 [shape = 'u8[4096]{0}', space=vmem, size = 0x1000, scoped, tag = 'input window, operand 0, single buffered']
    #allocation3 [shape = 's32[1]{0}', space=sflag, size = 0x4, scoped, tag = 'scoped memory for mlp_classifier_forward.1']
    #allocation4 [shape = 'u8[4096]{0}', space=vmem, size = 0x1000, scoped, tag = 'input window, operand 1, single buffered']
    #allocation5 [shape = 's32[1]{0}', space=sflag, size = 0x4, scoped, tag = 'scoped memory for mlp_classifier_forward.1']
    #allocation6 [shape = 'u8[32768]{0}', space=vmem, size = 0x8000, scoped, tag = 'input window, operand 3, single buffered']
    %10 = vsyncpa [#allocation3], 0
    %11 = vsyncpa [#allocation5], 0
    // Predicated region
    $region2: #{mlp_classifier_forward.1} parent=1 // pred_check
      _
    $region3: #{mlp_classifier_forward.1} parent=1 // pred_check_branch
      %13 = sbr.rel (0) target = $region5
    $region4: #{mlp_classifier_forward.1} parent=1 // pred_region
      %15 = vsyncadd [#allocation3], 0
      %s17 = sshll.u32 %s0, 4
      %s18 = int_to_ptr.hbm [resolvable:$true] %s17
      %s19 = sshll.u32 [#allocation2], 4
      %s20 = int_to_ptr.vmem [resolvable:$true] %s19
      %22 = dma.hbm_to_vmem [thread:$0]  %s18, 128, %s20, [#allocation3]
    $region5: #{mlp_classifier_forward.1} parent=1 // pred_fallthru
      _
    // Predicated region
    $region6: #{mlp_classifier_forward.1} parent=1 // pred_check
      _
    $region7: #{mlp_classifier_forward.1} parent=1 // pred_check_branch
      %24 = sbr.rel (0) target = $region9
    $region8: #{mlp_classifier_forward.1} parent=1 // pred_region
      %26 = vsyncadd [#allocation5], 0
      %s27 = sshll.u32 %s1, 4
      %s28 = int_to_ptr.hbm [resolvable:$true] %s27
      %s29 = sshll.u32 [#allocation4], 4
      %s30 = int_to_ptr.vmem [resolvable:$true] %s29
      %35 = dma.hbm_to_vmem [thread:$0]  %s28, 128, %s30, [#allocation5], 64, 64, 4
    $region9: #{mlp_classifier_forward.1} parent=1 // pred_fallthru
      _
    // Predicated region
    $region10: #{mlp_classifier_forward.1} parent=1 // pred_check
      _
    $region11: #{mlp_classifier_forward.1} parent=1 // pred_check_branch
      %37 = sbr.rel (0) target = $region13
    $region12: #{mlp_classifier_forward.1} parent=1 // pred_region
      _
    $region13: #{mlp_classifier_forward.1} parent=1 // pred_fallthru
      _
    // Predicated region
    $region14: #{mlp_classifier_forward.1} parent=1 // pred_check
      _
    $region15: #{mlp_classifier_forward.1} parent=1 // pred_check_branch
      %39 = sbr.rel (0) target = $region17
    $region16: #{mlp_classifier_forward.1} parent=1 // pred_region
      %41 = vsyncadd [#allocation5], 0
      %s42 = sshll.u32 %s3, 4
      %s43 = int_to_ptr.hbm [resolvable:$true] %s42
      %s44 = sshll.u32 [#allocation6], 4
      %s45 = int_to_ptr.vmem [resolvable:$true] %s44
      %50 = dma.hbm_to_vmem [thread:$0]  %s43, 1024, %s45, [#allocation5], 64, 64, 4
    $region17: #{mlp_classifier_forward.1} parent=1 // pred_fallthru
      _
    // Predicated region
    $region18: #{mlp_classifier_forward.1} parent=1 // pred_check
      _
    $region19: #{mlp_classifier_forward.1} parent=1 // pred_check_branch
      %52 = sbr.rel (0) target = $region21
    $region20: #{mlp_classifier_forward.1} parent=1 // pred_region
      _
    $region21: #{mlp_classifier_forward.1} parent=1 // pred_fallthru
      _
    // Predicated region
    $region22: #{mlp_classifier_forward.1} parent=1 // pred_check
      _
    $region23: #{mlp_classifier_forward.1} parent=1 // pred_check_branch
      %54 = sbr.rel (0) target = $region25
    $region24: #{mlp_classifier_forward.1} parent=1 // pred_region
      %56 = dma.done [#allocation3], 128
    $region25: #{mlp_classifier_forward.1} parent=1 // pred_fallthru
      _
    // Predicated region
    $region26: #{mlp_classifier_forward.1} parent=1 // pred_check
      _
    $region27: #{mlp_classifier_forward.1} parent=1 // pred_check_branch
      %58 = sbr.rel (0) target = $region29
    $region28: #{mlp_classifier_forward.1} parent=1 // pred_region
      %60 = dma.done [#allocation5], 128
    $region29: #{mlp_classifier_forward.1} parent=1 // pred_fallthru
      _
    // Predicated region
    $region30: #{mlp_classifier_forward.1} parent=1 // pred_check
      _
    $region31: #{mlp_classifier_forward.1} parent=1 // pred_check_branch
      %62 = sbr.rel (0) target = $region33
    $region32: #{mlp_classifier_forward.1} parent=1 // pred_region
      %64 = dma.done [#allocation5], 1024
    $region33: #{mlp_classifier_forward.1} parent=1 // pred_fallthru
      _
    %v66 = vld [vmem:[#allocation2] sm:$0xff]
    %v67 = vpack.c.bf16 %v66, %v66
    %v68 = vld [vmem:[#allocation4] sm:$0xf]
    %v69 = vld [vmem:[#allocation4 + $0x4] sm:$0xf]
    %v70 = vld [vmem:[%s2] sm:$0x1]
    %v72 = vperm.slane %v70, 0
    %v76 = vunpack.c.l.b16 %v68
    %v77 = vunpack.c.l.b16 %v69
    %v78 = vpack.c.b16 %v77, %v76
    %vm80 = vcmask 130048
    %v82 = vsel %vm80, %v67, 0
    %84 = vmatpush.bf16.msra.mxu0 0
    %85 = vmatpush.bf16.msra.mxu0 0
    %86 = vmatpush.bf16.msra.mxu0 0
    %87 = vmatpush.bf16.msra.mxu0 0
    %88 = vmatpush.bf16.msra.mxu0 0
    %89 = vmatpush.bf16.msra.mxu0 0
    %90 = vmatpush.bf16.msra.mxu0 0
    %91 = vmatpush.bf16.msra.mxu0 %v78
    %92 = vmatmul.bf16.gmra.mxu0 %v82
    %v93 = vpop.f32.mrf.mxu0
    %v94 = vadd.f32 %v72, %v93
    %v95 = vpop.f32.mrf.mxu0
    %96 = vdwg.mxu0
    %v97 = vmax.f32 %v94, 0.0
    %v98 = vpack.c.bf16 %v97, %v97
    %v99 = vld [vmem:[#allocation6] sm:$0xf]
    %v100 = vld [vmem:[#allocation6 + $0x4] sm:$0xf]
    %v101 = vld [vmem:[#allocation6 + $0x8] sm:$0xf]
    %v102 = vld [vmem:[#allocation6 + $0xc] sm:$0xf]
    %v103 = vld [vmem:[#allocation6 + $0x10] sm:$0xf]
    %v104 = vld [vmem:[#allocation6 + $0x14] sm:$0xf]
    %v105 = vld [vmem:[#allocation6 + $0x18] sm:$0xf]
    %v106 = vld [vmem:[#allocation6 + $0x1c] sm:$0xf]
    %v107 = vld [vmem:[#allocation6 + $0x20] sm:$0xf]
    %v108 = vld [vmem:[#allocation6 + $0x24] sm:$0xf]
    %v109 = vld [vmem:[#allocation6 + $0x28] sm:$0xf]
    %v110 = vld [vmem:[#allocation6 + $0x2c] sm:$0xf]
    %v111 = vld [vmem:[#allocation6 + $0x30] sm:$0xf]
    %v112 = vld [vmem:[#allocation6 + $0x34] sm:$0xf]
    %v113 = vld [vmem:[#allocation6 + $0x38] sm:$0xf]
    %v114 = vld [vmem:[#allocation6 + $0x3c] sm:$0xf]
    %v115 = vld [vmem:[%s4] sm:$0x1]
    %v117 = vperm.slane %v115, 0
    %v135 = vunpack.c.l.b16 %v99
    %v136 = vunpack.c.l.b16 %v100
    %v137 = vunpack.c.l.b16 %v101
    %v138 = vunpack.c.l.b16 %v102
    %v139 = vunpack.c.l.b16 %v103
    %v140 = vunpack.c.l.b16 %v104
    %v141 = vunpack.c.l.b16 %v105
    %v142 = vunpack.c.l.b16 %v106
    %v143 = vunpack.c.l.b16 %v107
    %v144 = vunpack.c.l.b16 %v108
    %v145 = vunpack.c.l.b16 %v109
    %v146 = vunpack.c.l.b16 %v110
    %v147 = vunpack.c.l.b16 %v111
    %v148 = vunpack.c.l.b16 %v112
    %v149 = vunpack.c.l.b16 %v113
    %v150 = vunpack.c.l.b16 %v114
    %v151 = vpack.c.b16 %v136, %v135
    %v152 = vpack.c.b16 %v138, %v137
    %v153 = vpack.c.b16 %v140, %v139
    %v154 = vpack.c.b16 %v142, %v141
    %v155 = vpack.c.b16 %v144, %v143
    %v156 = vpack.c.b16 %v146, %v145
    %v157 = vpack.c.b16 %v148, %v147
    %v158 = vpack.c.b16 %v150, %v149
    %167 = vmatpush.bf16.msra.mxu0 %v158
    %168 = vmatpush.bf16.msra.mxu0 %v157
    %169 = vmatpush.bf16.msra.mxu0 %v156
    %170 = vmatpush.bf16.msra.mxu0 %v155
    %171 = vmatpush.bf16.msra.mxu0 %v154
    %172 = vmatpush.bf16.msra.mxu0 %v153
    %173 = vmatpush.bf16.msra.mxu0 %v152
    %174 = vmatpush.bf16.msra.mxu0 %v151
    %175 = vmatmul.bf16.gmra.mxu0 %v98
    %v176 = vpop.f32.mrf.mxu0
    %v177 = vadd.f32 %v117, %v176
    %v178 = vpop.f32.mrf.mxu0
    %179 = vdwg.mxu0
    %180 = vmax.xlane.f32.xlu0 %v177
    %v181 = vpop.xlane.xlu0 %180
    %v182 = vsub.f32 %v177, %v181
    %v183 = vmul.f32 %v182, 1.442695
    %v184 = vpow.pop %v183
    %185 = vadd.xlane.f32.xlu0 %v184
    %v186 = vpop.xlane.xlu0 %185
    %v187 = vrcp.pop %v186
    %v188 = vmul.f32 %v186, %v187
    %v189 = vsub.f32 1.0, %v188
    %v190 = vmul.f32 %v187, %v189
    %v191 = vadd.f32 %v187, %v190
    %vm192 = vweird.f32 %v186
    %vm193 = vweird.f32 %v187
    %vm194 = vmor %vm192, %vm193
    %v195 = vsel %vm194, %v187, %v191
    %v196 = vand.u32 2147483647, %v186
    %vm197 = vcmp.eq.f32.partialorder %v196, 8.507059e+37
    %v198 = vand.u32 %v186, 2147483648
    %v199 = vor.u32 1.1754944e-38, %v198
    %v200 = vsel %vm197, %v199, %v195
    %v201 = vmul.f32 %v184, %v200
    %202 = vst [vmem:[%s5] sm:$0xff] %v201
    // Predicated region
    $region34: #{mlp_classifier_forward.1} parent=1 // pred_check
      _
    $region35: #{mlp_classifier_forward.1} parent=1 // pred_check_branch
      %204 = sbr.rel (0) target = $region37
    $region36: #{mlp_classifier_forward.1} parent=1 // pred_region
      _
    $region37: #{mlp_classifier_forward.1} parent=1 // pred_fallthru
      _
    // Predicated region
    $region38: #{mlp_classifier_forward.1} parent=1 // pred_check
      _
    $region39: #{mlp_classifier_forward.1} parent=1 // pred_check_branch
      %206 = sbr.rel (0) target = $region41
    $region40: #{mlp_classifier_forward.1} parent=1 // pred_region
      _
    $region41: #{mlp_classifier_forward.1} parent=1 // pred_fallthru
      _
    %207 = vsyncpa [#allocation3], 1
    %208 = vsyncpa [#allocation5], 1

</llo_original>
